<compile_context>
chip_gen: v5e
topology: v5e:2x2
jax: 0.10.0
libtpu: 0.0.40
codegen_flags: <defaults>
</compile_context>

<pallas_src>
import jax
import jax.numpy as jnp
from jax.experimental import pallas as pl
from jax.experimental.pallas import tpu as pltpu

LANES = 128      # vreg lane width
SUBLANES = 8     # f32 sublane tile
PACK_BF16 = 16   # bf16 packs 16 sublanes per vreg -> row offsets aligned to 16


def _round_up(x, m):
    return ((x + m - 1) // m) * m


def build_reinforce(size_ob, hidden_1, hidden_2, size_action, tb=8192):
    """Returns (pack_params, forward) for the given layer sizes.

    pack_params(w1, b1, w2, b2, w3, b3) -> single padded (P_ROWS, NP) bf16 buffer
      (weights stored (in, out); biases 1-D (out,)).  Done once per model.
    forward(ob, packed) -> softmax probabilities, shape (B, size_action), f32.
    """
    NP = _round_up(max(hidden_1, hidden_2, size_action), LANES)  # padded lane width

    # Row offsets into the packed bf16 parameter buffer (all 16-row aligned).
    r_w1 = 0
    r_b1 = _round_up(size_ob, PACK_BF16)
    r_w2 = r_b1 + PACK_BF16
    r_b2 = r_w2 + NP
    r_w3 = r_b2 + PACK_BF16
    r_b3 = r_w3 + NP
    p_rows = r_b3 + PACK_BF16

    def kernel(x_ref, p_ref, o_ref):
        # ob tile, cast to bf16 for single-pass MXU matmuls (f32 accumulation kept).
        x = x_ref[...].astype(jnp.bfloat16)              # (TB, size_ob)

        # out = relu(self.inp(ob))
        w1 = p_ref[r_w1:r_w1 + size_ob, :]               # (size_ob, NP) bf16
        b1 = p_ref[r_b1:r_b1 + 1, :].astype(jnp.float32)
        h = jnp.maximum(
            jnp.dot(x, w1, preferred_element_type=jnp.float32) + b1, 0.0)

        # out = relu(self.int(out))
        w2 = p_ref[r_w2:r_w2 + NP, :]                    # (NP, NP) bf16
        b2 = p_ref[r_b2:r_b2 + 1, :].astype(jnp.float32)
        h = jnp.maximum(
            jnp.dot(h.astype(jnp.bfloat16), w2,
                    preferred_element_type=jnp.float32) + b2, 0.0)

        # out = softmax(self.out(out), dim=-1)
        # Padded logit columns get bias = -1e30 (and zero weight columns), so the
        # softmax over all NP lanes equals softmax over the real size_action lanes.
        w3 = p_ref[r_w3:r_w3 + NP, :]                    # (NP, NP) bf16
        b3 = p_ref[r_b3:r_b3 + 1, :].astype(jnp.float32)
        logits = jnp.dot(h.astype(jnp.bfloat16), w3,
                         preferred_element_type=jnp.float32) + b3
        m = jnp.max(logits, axis=-1, keepdims=True)
        e = jnp.exp(logits - m)
        denom = jnp.sum(e, axis=-1, keepdims=True)
        probs = e / denom                                # exact divide (kernel not VALU-bound)

        # Store only the real action columns (narrow, size_action-wide output).
        o_ref[...] = probs[:, :size_action].astype(o_ref.dtype)

    def pack_params(w1, b1, w2, b2, w3, b3):
        p = jnp.zeros((p_rows, NP), jnp.float32)
        p = p.at[r_w1:r_w1 + size_ob, 0:hidden_1].set(w1.astype(jnp.float32))
        p = p.at[r_b1, 0:hidden_1].set(b1.reshape(-1).astype(jnp.float32))
        p = p.at[r_w2:r_w2 + hidden_1, 0:hidden_2].set(w2.astype(jnp.float32))
        p = p.at[r_b2, 0:hidden_2].set(b2.reshape(-1).astype(jnp.float32))
        p = p.at[r_w3:r_w3 + hidden_2, 0:size_action].set(w3.astype(jnp.float32))
        b3_row = jnp.full((NP,), -1e30, jnp.float32)
        b3_row = b3_row.at[0:size_action].set(b3.reshape(-1).astype(jnp.float32))
        p = p.at[r_b3, :].set(b3_row)
        return p.astype(jnp.bfloat16)                    # bf16 weights/biases (one small DMA)

    def forward(ob, packed):
        B = ob.shape[0]
        # Batch tile: at most `tb`, a multiple of 8, and small enough that the grid has
        # >= 2 steps when B allows it (so "parallel" feeds both v7x TensorCores).
        half = _round_up(max(pl.cdiv(B, 2), SUBLANES), SUBLANES)
        tb_eff = min(tb, half)
        grid = (pl.cdiv(B, tb_eff),)

        # Cost estimate reflects padded-NP matmuls, bf16 weight bytes, narrow f32 output.
        flops = 2 * B * (size_ob * NP + NP * NP + NP * NP)
        bytes_accessed = 4 * ob.size + 2 * packed.size + 4 * B * size_action
        cost = pl.CostEstimate(flops=int(flops),
                               transcendentals=int(B * NP),
                               bytes_accessed=int(bytes_accessed))

        return pl.pallas_call(
            kernel,
            out_shape=jax.ShapeDtypeStruct((B, size_action), jnp.float32),
            grid=grid,
            in_specs=[
                pl.BlockSpec((tb_eff, size_ob), lambda i: (i, 0)),     # ob tile
                pl.BlockSpec((p_rows, NP), lambda i: (0, 0)),          # packed params, resident
            ],
            out_specs=pl.BlockSpec((tb_eff, size_action), lambda i: (i, 0)),  # narrow output
            compiler_params=pltpu.CompilerParams(
                dimension_semantics=("parallel",)),
            cost_estimate=cost,
        )(ob.astype(jnp.float32), packed)                # ob.float() done in wrapper
    return pack_params, forward


def init_linear(key, fan_in, fan_out):
    # Mimics nn.Linear init: uniform(-1/sqrt(fan_in), 1/sqrt(fan_in)); stored as (in, out).
    kw, kb = jax.random.split(key)
    bound = 1.0 / jnp.sqrt(jnp.float32(fan_in))
    w = jax.random.uniform(kw, (fan_in, fan_out), jnp.float32, -bound, bound)
    b = jax.random.uniform(kb, (fan_out,), jnp.float32, -bound, bound)
    return w, b


if __name__ == "__main__":
    # Small shapes consistent with the module's forward.
    B = 16             # batch of observations (grid of 2 steps at tb_eff=8)
    SIZE_OB = 8        # size_ob
    HIDDEN_1 = 32      # hyperParams.HIDDEN_SIZE_1
    HIDDEN_2 = 32      # hyperParams.HIDDEN_SIZE_2
    SIZE_ACTION = 4    # size_action

    key = jax.random.PRNGKey(0)
    k_ob, k1, k2, k3 = jax.random.split(key, 4)

    ob = jax.random.normal(k_ob, (B, SIZE_OB), jnp.float32)
    w1, b1 = init_linear(k1, SIZE_OB, HIDDEN_1)
    w2, b2 = init_linear(k2, HIDDEN_1, HIDDEN_2)
    w3, b3 = init_linear(k3, HIDDEN_2, SIZE_ACTION)

    pack_params, forward = build_reinforce(SIZE_OB, HIDDEN_1, HIDDEN_2, SIZE_ACTION)
    packed = pack_params(w1, b1, w2, b2, w3, b3)   # done once; re-used every call

    out = forward(ob, packed)
    out = jax.block_until_ready(out)

    # Pure-JAX reference that mirrors the kernel's bf16-operand / f32-accumulate matmuls.
    def bf(x):
        return x.astype(jnp.bfloat16).astype(jnp.float32)

    def ref(x):
        h1 = jnp.maximum(bf(x) @ bf(w1) + bf(b1), 0.0)
        h2 = jnp.maximum(bf(h1) @ bf(w2) + bf(b2), 0.0)
        logits = bf(h2) @ bf(w3) + bf(b3)
        return jax.nn.softmax(logits, axis=-1)

    expected = ref(ob)
    assert out.shape == (B, SIZE_ACTION)
    assert jnp.allclose(out, expected, atol=2e-3, rtol=2e-3)
    assert jnp.allclose(jnp.sum(out, axis=-1), 1.0, atol=1e-3)  # exact softmax normalization

    print("KERNEL_OK")
</pallas_src>

<mosaic_0001>
module attributes {stable_mosaic.version = 11 : i64} {
  func.func @kernel(%arg0: i32, %arg1: memref<8x8xf32, #tpu.memory_space<vmem>>, %arg2: memref<320x128xbf16, #tpu.memory_space<vmem>>, %arg3: memref<8x4xf32, #tpu.memory_space<vmem>>) attributes {dimension_semantics = [#tpu.dimension_semantics<parallel>], iteration_bounds = array<i64: 2>, scalar_prefetch = 0 : i64, scratch_operands = 0 : i64, tpu.core_type = #tpu.core_type<tc>, window_params = [{transform_indices = @transform_0, window_bounds = array<i64: 8, 8>}, {pipeline_mode = #tpu.pipeline_mode<synchronous>, transform_indices = @transform_1, window_bounds = array<i64: 320, 128>}, {transform_indices = @transform_2, window_bounds = array<i64: 8, 4>}]} {
    %c0 = arith.constant 0 : index
    %c0_0 = arith.constant 0 : index
    %0 = vector.load %arg1[%c0, %c0_0] : memref<8x8xf32, #tpu.memory_space<vmem>>, vector<8x8xf32>
    %1 = arith.truncf %0 : vector<8x8xf32> to vector<8x8xbf16>
    %c0_1 = arith.constant 0 : index
    %c0_2 = arith.constant 0 : index
    %2 = vector.load %arg2[%c0_1, %c0_2] : memref<320x128xbf16, #tpu.memory_space<vmem>>, vector<8x128xbf16>
    %c16 = arith.constant 16 : index
    %c0_3 = arith.constant 0 : index
    %3 = vector.load %arg2[%c16, %c0_3] : memref<320x128xbf16, #tpu.memory_space<vmem>>, vector<1x128xbf16>
    %4 = arith.extf %3 : vector<1x128xbf16> to vector<1x128xf32>
    %cst = arith.constant dense<0.000000e+00> : vector<8x128xf32>
    %5 = tpu.matmul %1, %2, %cst {dimension_numbers = #tpu.dot_dimension_numbers<[1], [0], [0], [1], [0, 0, 1, 1], [], []>} : vector<8x8xbf16>, vector<8x128xbf16>, vector<8x128xf32> -> vector<8x128xf32>
    %6 = vector.broadcast %4 : vector<1x128xf32> to vector<8x128xf32>
    %7 = arith.addf %5, %6 : vector<8x128xf32>
    %cst_4 = arith.constant 0.000000e+00 : f32
    %8 = vector.broadcast %cst_4 : f32 to vector<8x128xf32>
    %9 = arith.maximumf %7, %8 : vector<8x128xf32>
    %c32 = arith.constant 32 : index
    %c0_5 = arith.constant 0 : index
    %10 = vector.load %arg2[%c32, %c0_5] : memref<320x128xbf16, #tpu.memory_space<vmem>>, vector<128x128xbf16>
    %c160 = arith.constant 160 : index
    %c0_6 = arith.constant 0 : index
    %11 = vector.load %arg2[%c160, %c0_6] : memref<320x128xbf16, #tpu.memory_space<vmem>>, vector<1x128xbf16>
    %12 = arith.extf %11 : vector<1x128xbf16> to vector<1x128xf32>
    %13 = arith.truncf %9 : vector<8x128xf32> to vector<8x128xbf16>
    %cst_7 = arith.constant dense<0.000000e+00> : vector<8x128xf32>
    %14 = tpu.matmul %13, %10, %cst_7 {dimension_numbers = #tpu.dot_dimension_numbers<[1], [0], [0], [1], [0, 0, 1, 1], [], []>} : vector<8x128xbf16>, vector<128x128xbf16>, vector<8x128xf32> -> vector<8x128xf32>
    %15 = vector.broadcast %12 : vector<1x128xf32> to vector<8x128xf32>
    %16 = arith.addf %14, %15 : vector<8x128xf32>
    %cst_8 = arith.constant 0.000000e+00 : f32
    %17 = vector.broadcast %cst_8 : f32 to vector<8x128xf32>
    %18 = arith.maximumf %16, %17 : vector<8x128xf32>
    %c176 = arith.constant 176 : index
    %c0_9 = arith.constant 0 : index
    %19 = vector.load %arg2[%c176, %c0_9] : memref<320x128xbf16, #tpu.memory_space<vmem>>, vector<128x128xbf16>
    %c304 = arith.constant 304 : index
    %c0_10 = arith.constant 0 : index
    %20 = vector.load %arg2[%c304, %c0_10] : memref<320x128xbf16, #tpu.memory_space<vmem>>, vector<1x128xbf16>
    %21 = arith.extf %20 : vector<1x128xbf16> to vector<1x128xf32>
    %22 = arith.truncf %18 : vector<8x128xf32> to vector<8x128xbf16>
    %cst_11 = arith.constant dense<0.000000e+00> : vector<8x128xf32>
    %23 = tpu.matmul %22, %19, %cst_11 {dimension_numbers = #tpu.dot_dimension_numbers<[1], [0], [0], [1], [0, 0, 1, 1], [], []>} : vector<8x128xbf16>, vector<128x128xbf16>, vector<8x128xf32> -> vector<8x128xf32>
    %24 = vector.broadcast %21 : vector<1x128xf32> to vector<8x128xf32>
    %25 = arith.addf %23, %24 : vector<8x128xf32>
    %cst_12 = arith.constant dense<0xFF800000> : vector<8xf32>
    %26 = vector.multi_reduction <maximumf>, %25, %cst_12 [1] : vector<8x128xf32> to vector<8xf32>
    %27 = vector.shape_cast %26 : vector<8xf32> to vector<8x1xf32>
    %28 = vector.broadcast %27 : vector<8x1xf32> to vector<8x128xf32>
    %29 = arith.subf %25, %28 : vector<8x128xf32>
    %30 = math.exp %29 : vector<8x128xf32>
    %cst_13 = arith.constant dense<0.000000e+00> : vector<8xf32>
    %31 = vector.multi_reduction <add>, %30, %cst_13 [1] : vector<8x128xf32> to vector<8xf32>
    %32 = vector.shape_cast %31 : vector<8xf32> to vector<8x1xf32>
    %33 = vector.broadcast %32 : vector<8x1xf32> to vector<8x128xf32>
    %34 = arith.divf %30, %33 : vector<8x128xf32>
    %35 = vector.extract_strided_slice %34 {offsets = [0, 0], sizes = [8, 4], strides = [1, 1]} : vector<8x128xf32> to vector<8x4xf32>
    %c0_14 = arith.constant 0 : index
    %c0_15 = arith.constant 0 : index
    %36 = vector.load %arg3[%c0_14, %c0_15] : memref<8x4xf32, #tpu.memory_space<vmem>>, vector<8x4xf32>
    tpu.vector_store %arg3[%c0_14, %c0_15], %35 {strides = array<i32>} : memref<8x4xf32, #tpu.memory_space<vmem>>, vector<8x4xf32>,
    return
  }
  func.func @transform_0(%arg0: i32) -> (i32, i32) {
    %c0_i32 = arith.constant 0 : i32
    %c0_i32_0 = arith.constant 0 : i32
    return %arg0, %c0_i32 : i32, i32
  }
  func.func @transform_1(%arg0: i32) -> (i32, i32) {
    %c0_i32 = arith.constant 0 : i32
    %c0_i32_0 = arith.constant 0 : i32
    %c0_i32_1 = arith.constant 0 : i32
    return %c0_i32, %c0_i32_0 : i32, i32
  }
  func.func @transform_2(%arg0: i32) -> (i32, i32) {
    %c0_i32 = arith.constant 0 : i32
    %c0_i32_0 = arith.constant 0 : i32
    return %arg0, %c0_i32 : i32, i32
  }
}

</mosaic_0001>

<llo_original>
// kernel: tpu_custom_call.1
$region0: #{tpu_custom_call.1}
  #allocation0 [shape = 'u32[]', space=smem, size = 0x4, offset = 0x4, fixed_abs, tag = 'smem constant byte address 0x4 - core index']
  #allocation1 [shape = 'u32[72,128]{1,0:T(1,128)}', space=vmem, size = 0x9000, scoped, tag = 'internal scratch']
  %s0 = inlined_call_operand.vmem [shape: f32[16,8], index: 0, kind: input, shape index: {}]
  %s1 = inlined_call_operand.hbm [shape: bf16[320,128], index: 1, kind: input, shape index: {}]
  %s2 = inlined_call_operand.vmem [shape: f32[16,4], index: 2, kind: output, shape index: {}]
  %s3 = sld [smem:[#allocation0]]
  $region45: #{tpu_custom_call.1} parent=0
    _
  %s5 = ssub.s32 1, %s3
  %s6 = scalar_select 0, %s5, %s3
  $region1: #{tpu_custom_call.1} parent=0
    #allocation2 [shape = 'u8[81920]{0}', space=vmem, size = 0x14000, scoped, tag = 'input window, operand 1, single buffered']
    #allocation3 [shape = 's32[2]{0}', space=sflag, size = 0x8, scoped, tag = 'scoped memory for tpu_custom_call.1']
    %7 = vsyncpa [#allocation3], 0
    loop: start=0, step=1, limit=4
    $region2: #{tpu_custom_call.1} parent=1 // loop_pre_header
      _
    $region3: #{tpu_custom_call.1} parent=1 // loop_header
      %s9 = sphi 0, %s13
      %p10 = scmp.ge.s32.totalorder %s9, 4
      %s19 = sphi 0, %s21
      %s22 = sphi 0, %s19
      %s23 = sphi 0, %s22
      %s39 = sphi 0, %s23
      %s43 = sphi 0, %s43
      %s45 = sphi 0, %s43
      %s46 = sphi 0, %s45
      %s60 = sphi 0, %s46
      %s66 = sphi 0, %s68
      %s69 = sphi 0, %s66
      %s70 = sphi 0, %s69
      %s86 = sphi 0, %s70
    $region4: #{tpu_custom_call.1} parent=1 // loop_header_branch
      %12 = sbr.rel (%p10) target = $region8
    $region5: #{tpu_custom_call.1} parent=1 // loop_body
      %s14 = ssub.s32 %s9, 1
      %s15 = ssub.s32 %s9, 2
      %s16 = sadd.s32 %s9, 1
      %s17 = ssub.s32 %s9, %s16
      %p18 = scmp.eq.s32.totalorder %s17, 0
      %s20 = sadd.s32 %s19, 1
      %s21 = scalar_select %p18, %s19, %s20
      %p24 = pneg %p18
      %p25 = scmp.eq.s32.totalorder %s9, 1
      %p26 = por %p24, %p25
      %p27 = scmp.ne.s32.totalorder %s19, %s22
      %p28 = scmp.eq.s32.totalorder %s9, 0
      %p29 = por %p27, %p28
      %p30 = scmp.ne.s32.totalorder %s19, %s22
      %p31 = scmp.eq.s32.totalorder %s14, 1
      %p32 = por %p30, %p31
      %p33 = scmp.ne.s32.totalorder %s22, %s23
      %p34 = scmp.eq.s32.totalorder %s14, 0
      %p35 = por %p33, %p34
      %p36 = scmp.ne.s32.totalorder %s22, %s23
      %p37 = scmp.eq.s32.totalorder %s15, 1
      %p38 = por %p36, %p37
      %p40 = scmp.ne.s32.totalorder %s23, %s39
      %p41 = scmp.eq.s32.totalorder %s15, 0
      %p42 = por %p40, %p41
      %s44 = sadd.s32 %s43, 1
      %p47 = scmp.eq.s32.totalorder %s9, 1
      %p48 = scmp.ne.s32.totalorder %s43, %s45
      %p49 = scmp.eq.s32.totalorder %s9, 0
      %p50 = por %p48, %p49
      %p51 = scmp.ne.s32.totalorder %s43, %s45
      %p52 = scmp.eq.s32.totalorder %s14, 1
      %p53 = por %p51, %p52
      %p54 = scmp.ne.s32.totalorder %s45, %s46
      %p55 = scmp.eq.s32.totalorder %s14, 0
      %p56 = por %p54, %p55
      %p57 = scmp.ne.s32.totalorder %s45, %s46
      %p58 = scmp.eq.s32.totalorder %s15, 1
      %p59 = por %p57, %p58
      %p61 = scmp.ne.s32.totalorder %s46, %s60
      %p62 = scmp.eq.s32.totalorder %s15, 0
      %p63 = por %p61, %p62
      %s64 = ssub.s32 %s9, %s16
      %p65 = scmp.eq.s32.totalorder %s64, 0
      %s67 = sadd.s32 %s66, 1
      %s68 = scalar_select %p65, %s66, %s67
      %p71 = pneg %p65
      %p72 = scmp.eq.s32.totalorder %s9, 1
      %p73 = por %p71, %p72
      %p74 = scmp.ne.s32.totalorder %s66, %s69
      %p75 = scmp.eq.s32.totalorder %s9, 0
      %p76 = por %p74, %p75
      %p77 = scmp.ne.s32.totalorder %s66, %s69
      %p78 = scmp.eq.s32.totalorder %s14, 1
      %p79 = por %p77, %p78
      %p80 = scmp.ne.s32.totalorder %s69, %s70
      %p81 = scmp.eq.s32.totalorder %s14, 0
      %p82 = por %p80, %p81
      %p83 = scmp.ne.s32.totalorder %s69, %s70
      %p84 = scmp.eq.s32.totalorder %s15, 1
      %p85 = por %p83, %p84
      %p87 = scmp.ne.s32.totalorder %s70, %s86
      %p88 = scmp.eq.s32.totalorder %s15, 0
      %p89 = por %p87, %p88
      %p90 = scmp.le.s32.totalorder 1, %s9
      %p91 = scmp.lt.s32.totalorder %s9, 3
      %p92 = pnand %p90, %p91
      %p93 = pneg %p92
      // Predicated region
      $region9: #{tpu_custom_call.1} parent=5 // pred_check
        _
      $region10: #{tpu_custom_call.1} parent=5 // pred_check_branch
        %95 = sbr.rel (%p92) target = $region12
      $region11: #{tpu_custom_call.1} parent=5 // pred_region
        %s96 = ssub.s32 %s9, 1
        // Predicated region
        $region13: #{tpu_custom_call.1} parent=11 // pred_check
          %p97 = pneg %p56
        $region14: #{tpu_custom_call.1} parent=11 // pred_check_branch
          %99 = sbr.rel (%p97) target = $region16
        $region15: #{tpu_custom_call.1} parent=11 // pred_region
          %101 = vsyncadd [#allocation3], 0
          %s102 = sshll.u32 %s1, 4
          %s103 = int_to_ptr.hbm [resolvable:$true] %s102
          %s104 = sshll.u32 [#allocation2], 4
          %s105 = int_to_ptr.vmem [resolvable:$true] %s104
          %110 = dma.hbm_to_vmem [thread:$0]  %s103, 2560, %s105, [#allocation3], 64, 64, 4
        $region16: #{tpu_custom_call.1} parent=11 // pred_fallthru
          _
      $region12: #{tpu_custom_call.1} parent=5 // pred_fallthru
        _
      %p111 = scmp.lt.s32.totalorder %s9, 2
      // Predicated region
      $region17: #{tpu_custom_call.1} parent=5 // pred_check
        %p112 = pneg %p111
      $region18: #{tpu_custom_call.1} parent=5 // pred_check_branch
        %114 = sbr.rel (%p112) target = $region20
      $region19: #{tpu_custom_call.1} parent=5 // pred_region
        // Predicated region
        $region21: #{tpu_custom_call.1} parent=19 // pred_check
          %p115 = pneg %p29
        $region22: #{tpu_custom_call.1} parent=19 // pred_check_branch
          %117 = sbr.rel (%p115) target = $region24
        $region23: #{tpu_custom_call.1} parent=19 // pred_region
          %p118 = scmp.lt.s32.totalorder %s9, 1
          %s119 = scalar_select %p118, %s9, 1
          %s120 = smul.addr %s119, 8
          %s121 = scalar_lea.vmem %s0, %s120
        $region24: #{tpu_custom_call.1} parent=19 // pred_fallthru
          _
      $region20: #{tpu_custom_call.1} parent=5 // pred_fallthru
        _
      %p122 = scmp.le.s32.totalorder 1, %s9
      %p123 = scmp.lt.s32.totalorder %s9, 3
      %p124 = pnand %p122, %p123
      %p125 = pneg %p124
      // Predicated region
      $region25: #{tpu_custom_call.1} parent=5 // pred_check
        _
      $region26: #{tpu_custom_call.1} parent=5 // pred_check_branch
        %127 = sbr.rel (%p124) target = $region28
      $region27: #{tpu_custom_call.1} parent=5 // pred_region
        %s128 = ssub.s32 %s9, 1
        // Predicated region
        $region29: #{tpu_custom_call.1} parent=27 // pred_check
          %p129 = pneg %p56
        $region30: #{tpu_custom_call.1} parent=27 // pred_check_branch
          %131 = sbr.rel (%p129) target = $region32
        $region31: #{tpu_custom_call.1} parent=27 // pred_region
          %133 = dma.done [#allocation3], 2560
        $region32: #{tpu_custom_call.1} parent=27 // pred_fallthru
          _
        %p134 = scmp.lt.s32.totalorder %s14, 1
        %s135 = scalar_select %p134, %s14, 1
        %s136 = smul.addr %s135, 8
        %s137 = scalar_lea.vmem %s0, %s136
        %p138 = pneg %p35
        %p139 = pneg %p32
        %p140 = pneg %p56
        %p141 = pneg %p53
        %p142 = pneg %p82
        %p143 = pneg %p79
        %p144 = scmp.lt.s32.totalorder %s14, 1
        %s145 = scalar_select %p144, %s14, 1
        %s146 = smul.addr %s145, 8
        %s147 = scalar_lea.vmem %s2, %s146
        %p148 = scmp.lt.s32.totalorder %s14, 1
        %s149 = scalar_select %p148, %s14, 1
        %s150 = smul.addr %s149, 8
        %s151 = scalar_lea.vmem %s0, %s150
        %p152 = scmp.lt.s32.totalorder %s14, 1
        %s153 = scalar_select %p152, %s14, 1
        %s154 = smul.addr %s153, 8
        %s155 = scalar_lea.vmem %s2, %s154
        %v157 = vld [vmem:[%s151] sm:$0xff]
        %v158 = vpack.c.bf16 %v157, %v157
        %v159 = vld [vmem:[#allocation2] sm:$0xf]
        %v160 = vld [vmem:[#allocation2 + $0x8] sm:$0x1]
        %v161 = vunpack.c.l.bf16 %v160
        %v162 = vperm.slane %v161, 0
        %vm163 = vcmask 64512
        %v165 = vsel %vm163, %v158, 0
        %vm167 = vcmask 1043456
        %v169 = vsel %vm167, %v159, 0
        %171 = vmatpush.bf16.msra.mxu0 0
        %172 = vmatpush.bf16.msra.mxu0 0
        %173 = vmatpush.bf16.msra.mxu0 0
        %174 = vmatpush.bf16.msra.mxu0 0
        %175 = vmatpush.bf16.msra.mxu0 0
        %176 = vmatpush.bf16.msra.mxu0 0
        %177 = vmatpush.bf16.msra.mxu0 0
        %178 = vmatpush.bf16.msra.mxu0 %v169
        %179 = vmatmul.bf16.gmra.mxu0 %v165
        %v180 = vpop.f32.mrf.mxu0
        %v181 = vadd.f32 %v162, %v180
        %v182 = vpop.f32.mrf.mxu0
        %183 = vdwg.mxu0
        %v184 = vmax.f32 %v181, 0.0
        %v185 = vld [vmem:[#allocation2 + $0x10] sm:$0xf]
        %v186 = vld [vmem:[#allocation2 + $0x14] sm:$0xf]
        %v187 = vld [vmem:[#allocation2 + $0x18] sm:$0xf]
        %v188 = vld [vmem:[#allocation2 + $0x1c] sm:$0xf]
        %v189 = vld [vmem:[#allocation2 + $0x20] sm:$0xf]
        %v190 = vld [vmem:[#allocation2 + $0x24] sm:$0xf]
        %v191 = vld [vmem:[#allocation2 + $0x28] sm:$0xf]
        %v192 = vld [vmem:[#allocation2 + $0x2c] sm:$0xf]
        %v193 = vld [vmem:[#allocation2 + $0x30] sm:$0xf]
        %v194 = vld [vmem:[#allocation2 + $0x34] sm:$0xf]
        %v195 = vld [vmem:[#allocation2 + $0x38] sm:$0xf]
        %v196 = vld [vmem:[#allocation2 + $0x3c] sm:$0xf]
        %v197 = vld [vmem:[#allocation2 + $0x40] sm:$0xf]
        %v198 = vld [vmem:[#allocation2 + $0x44] sm:$0xf]
        %v199 = vld [vmem:[#allocation2 + $0x48] sm:$0xf]
        %v200 = vld [vmem:[#allocation2 + $0x4c] sm:$0xf]
        %v201 = vld [vmem:[#allocation2 + $0x50] sm:$0x1]
        %v202 = vunpack.c.l.bf16 %v201
        %v203 = vpack.c.bf16 %v184, %v184
        %v204 = vperm.slane %v202, 0
        %v221 = vunpack.c.l.b16 %v185
        %v222 = vunpack.c.l.b16 %v186
        %v223 = vunpack.c.l.b16 %v187
        %v224 = vunpack.c.l.b16 %v188
        %v225 = vunpack.c.l.b16 %v189
        %v226 = vunpack.c.l.b16 %v190
        %v227 = vunpack.c.l.b16 %v191
        %v228 = vunpack.c.l.b16 %v192
        %v229 = vunpack.c.l.b16 %v193
        %v230 = vunpack.c.l.b16 %v194
        %v231 = vunpack.c.l.b16 %v195
        %v232 = vunpack.c.l.b16 %v196
        %v233 = vunpack.c.l.b16 %v197
        %v234 = vunpack.c.l.b16 %v198
        %v235 = vunpack.c.l.b16 %v199
        %v236 = vunpack.c.l.b16 %v200
        %v237 = vpack.c.b16 %v222, %v221
        %v238 = vpack.c.b16 %v224, %v223
        %v239 = vpack.c.b16 %v226, %v225
        %v240 = vpack.c.b16 %v228, %v227
        %v241 = vpack.c.b16 %v230, %v229
        %v242 = vpack.c.b16 %v232, %v231
        %v243 = vpack.c.b16 %v234, %v233
        %v244 = vpack.c.b16 %v236, %v235
        %253 = vmatpush.bf16.msra.mxu0 %v244
        %254 = vmatpush.bf16.msra.mxu0 %v243
        %255 = vmatpush.bf16.msra.mxu0 %v242
        %256 = vmatpush.bf16.msra.mxu0 %v241
        %257 = vmatpush.bf16.msra.mxu0 %v240
        %258 = vmatpush.bf16.msra.mxu0 %v239
        %259 = vmatpush.bf16.msra.mxu0 %v238
        %260 = vmatpush.bf16.msra.mxu0 %v237
        %261 = vmatmul.bf16.gmra.mxu0 %v203
        %v262 = vpop.f32.mrf.mxu0
        %v263 = vadd.f32 %v204, %v262
        %v264 = vpop.f32.mrf.mxu0
        %265 = vdwg.mxu0
        %v266 = vmax.f32 %v263, 0.0
        %v267 = vld [vmem:[#allocation2 + $0x58] sm:$0xf]
        %v268 = vld [vmem:[#allocation2 + $0x5c] sm:$0xf]
        %v269 = vld [vmem:[#allocation2 + $0x60] sm:$0xf]
        %v270 = vld [vmem:[#allocation2 + $0x64] sm:$0xf]
        %v271 = vld [vmem:[#allocation2 + $0x68] sm:$0xf]
        %v272 = vld [vmem:[#allocation2 + $0x6c] sm:$0xf]
        %v273 = vld [vmem:[#allocation2 + $0x70] sm:$0xf]
        %v274 = vld [vmem:[#allocation2 + $0x74] sm:$0xf]
        %v275 = vld [vmem:[#allocation2 + $0x78] sm:$0xf]
        %v276 = vld [vmem:[#allocation2 + $0x7c] sm:$0xf]
        %v277 = vld [vmem:[#allocation2 + $0x80] sm:$0xf]
        %v278 = vld [vmem:[#allocation2 + $0x84] sm:$0xf]
        %v279 = vld [vmem:[#allocation2 + $0x88] sm:$0xf]
        %v280 = vld [vmem:[#allocation2 + $0x8c] sm:$0xf]
        %v281 = vld [vmem:[#allocation2 + $0x90] sm:$0xf]
        %v282 = vld [vmem:[#allocation2 + $0x94] sm:$0xf]
        %v283 = vld [vmem:[#allocation2 + $0x98] sm:$0x1]
        %v284 = vunpack.c.l.bf16 %v283
        %v285 = vpack.c.bf16 %v266, %v266
        %v286 = vperm.slane %v284, 0
        %v303 = vunpack.c.l.b16 %v267
        %v304 = vunpack.c.l.b16 %v268
        %v305 = vunpack.c.l.b16 %v269
        %v306 = vunpack.c.l.b16 %v270
        %v307 = vunpack.c.l.b16 %v271
        %v308 = vunpack.c.l.b16 %v272
        %v309 = vunpack.c.l.b16 %v273
        %v310 = vunpack.c.l.b16 %v274
        %v311 = vunpack.c.l.b16 %v275
        %v312 = vunpack.c.l.b16 %v276
        %v313 = vunpack.c.l.b16 %v277
        %v314 = vunpack.c.l.b16 %v278
        %v315 = vunpack.c.l.b16 %v279
        %v316 = vunpack.c.l.b16 %v280
        %v317 = vunpack.c.l.b16 %v281
        %v318 = vunpack.c.l.b16 %v282
        %v319 = vpack.c.b16 %v304, %v303
        %v320 = vpack.c.b16 %v306, %v305
        %v321 = vpack.c.b16 %v308, %v307
        %v322 = vpack.c.b16 %v310, %v309
        %v323 = vpack.c.b16 %v312, %v311
        %v324 = vpack.c.b16 %v314, %v313
        %v325 = vpack.c.b16 %v316, %v315
        %v326 = vpack.c.b16 %v318, %v317
        %335 = vmatpush.bf16.msra.mxu0 %v326
        %336 = vmatpush.bf16.msra.mxu0 %v325
        %337 = vmatpush.bf16.msra.mxu0 %v324
        %338 = vmatpush.bf16.msra.mxu0 %v323
        %339 = vmatpush.bf16.msra.mxu0 %v322
        %340 = vmatpush.bf16.msra.mxu0 %v321
        %341 = vmatpush.bf16.msra.mxu0 %v320
        %342 = vmatpush.bf16.msra.mxu0 %v319
        %343 = vmatmul.bf16.gmra.mxu0 %v285
        %v344 = vpop.f32.mrf.mxu0
        %v345 = vadd.f32 %v286, %v344
        %v346 = vpop.f32.mrf.mxu0
        %347 = vdwg.mxu0
        %348 = vmax.xlane.f32.xlu0 %v345
        %v349 = vpop.xlane.xlu0 %348
        %v350 = vsub.f32 %v345, %v349
        %v351 = vmul.f32 %v350, 1.442695
        %v352 = vpow.pop %v351
        %353 = vadd.xlane.f32.xlu0 %v352
        %v354 = vpop.xlane.xlu0 %353
        %v355 = vrcp.pop %v354
        %v356 = vmul.f32 %v354, %v355
        %v357 = vsub.f32 1.0, %v356
        %v358 = vmul.f32 %v355, %v357
        %v359 = vadd.f32 %v355, %v358
        %vm360 = vweird.f32 %v354
        %vm361 = vweird.f32 %v355
        %vm362 = vmor %vm360, %vm361
        %v363 = vsel %vm362, %v355, %v359
        %v364 = vand.u32 2147483647, %v354
        %vm365 = vcmp.eq.f32.partialorder %v364, 8.507059e+37
        %v366 = vand.u32 %v354, 2147483648
        %v367 = vor.u32 1.1754944e-38, %v366
        %v368 = vsel %vm365, %v367, %v363
        %v369 = vmul.f32 %v352, %v368
        %vm370 = vcmask 31744
        %371 = vst.msk [vmem:[%s155] sm:$0xff] %vm370, %v369
        %p372 = scmp.lt.s32.totalorder %s14, 1
        %s373 = scalar_select %p372, %s14, 1
        %s374 = smul.addr %s373, 8
        %s375 = scalar_lea.vmem %s2, %s374
        // Predicated region
        $region33: #{tpu_custom_call.1} parent=27 // pred_check
          %p376 = pneg %p79
        $region34: #{tpu_custom_call.1} parent=27 // pred_check_branch
          %378 = sbr.rel (%p376) target = $region36
        $region35: #{tpu_custom_call.1} parent=27 // pred_region
          _
        $region36: #{tpu_custom_call.1} parent=27 // pred_fallthru
          _
      $region28: #{tpu_custom_call.1} parent=5 // pred_fallthru
        _
      %p379 = scmp.le.s32.totalorder 2, %s9
      // Predicated region
      $region37: #{tpu_custom_call.1} parent=5 // pred_check
        %p380 = pneg %p379
      $region38: #{tpu_custom_call.1} parent=5 // pred_check_branch
        %382 = sbr.rel (%p380) target = $region40
      $region39: #{tpu_custom_call.1} parent=5 // pred_region
        %s383 = ssub.s32 %s9, 2
        // Predicated region
        $region41: #{tpu_custom_call.1} parent=39 // pred_check
          %p384 = pneg %p85
        $region42: #{tpu_custom_call.1} parent=39 // pred_check_branch
          %386 = sbr.rel (%p384) target = $region44
        $region43: #{tpu_custom_call.1} parent=39 // pred_region
          %p387 = scmp.lt.s32.totalorder %s15, 1
          %s388 = scalar_select %p387, %s15, 1
          %s389 = smul.addr %s388, 8
          %s390 = scalar_lea.vmem %s2, %s389
        $region44: #{tpu_custom_call.1} parent=39 // pred_fallthru
          _
      $region40: #{tpu_custom_call.1} parent=5 // pred_fallthru
        _
    $region6: #{tpu_custom_call.1} parent=1 // loop_footer
      %s13 = sadd.s32 1, %s9
    $region7: #{tpu_custom_call.1} parent=1 // loop_footer_branch
      %8 = sbr.rel target = $region3
    $region8: #{tpu_custom_call.1} parent=1 // loop_exit
      _
    %391 = vsyncpa [#allocation3], 1
    %s392 = scalar_lea.sflag [#allocation3], 1
    %393 = vsyncpa %s392, 1

</llo_original>
